<compile_context>
chip_gen: v6e
topology: v6e:2x2x1
jax: 0.10.0
libtpu: 0.0.40
codegen_flags: <defaults>
</compile_context>

<pallas_src>
import jax
import jax.numpy as jnp
from jax.experimental import pallas as pl
from jax.experimental.pallas import tpu as pltpu


def _vpt_kernel(x_ref, prompt_ref, out_ref):
    # x_ref:      (Bt, S, D)      batch tile of the input
    # prompt_ref: (1,  T, D)      shared prompt embeddings (batch-invariant)
    # out_ref:    (Bt, S + T, D)
    Bt, S, D = x_ref.shape
    T = prompt_ref.shape[1]

    # CLS token (first token of x).
    out_ref[:, 0:1, :] = x_ref[:, 0:1, :]

    # Prompt tokens, broadcast across the batch tile.
    out_ref[:, pl.ds(1, T), :] = jnp.broadcast_to(prompt_ref[...], (Bt, T, D))

    # Remaining tokens of x (static guard: no zero-size slice when S == 1).
    if S > 1:
        out_ref[:, pl.ds(1 + T, S - 1), :] = x_ref[:, pl.ds(1, S - 1), :]


def _pick_batch_tile(B, S, T, D, itemsize):
    """Largest divisor of B whose (x + out) block stays under a VMEM budget
    and, when B >= 2, leaves at least 2 grid steps (v7x has 2 TensorCores)."""
    per_batch_elem = (S + (S + T)) * D * itemsize      # x block + out block rows
    budget = 4 * 1024 * 1024                           # per-step; ~8 MiB double-buffered
    cap = max(1, budget // max(per_batch_elem, 1))
    if B >= 2:
        cap = min(cap, B // 2)                         # keep >= 2 grid steps
    cap = max(1, min(cap, B))
    bt = 1
    for d in range(1, cap + 1):
        if B % d == 0:
            bt = d
    return bt


def vpt_forward(x, prompt_embeddings):
    """x: (B, S, D), prompt_embeddings: (1, T, D). Returns (B, S + T, D)."""
    B, S, D = x.shape
    _, T, Dp = prompt_embeddings.shape
    assert D == Dp
    assert prompt_embeddings.dtype == x.dtype

    itemsize = jnp.dtype(x.dtype).itemsize
    Bt = _pick_batch_tile(B, S, T, D, itemsize)
    grid = (B // Bt,)

    out_shape = jax.ShapeDtypeStruct((B, S + T, D), x.dtype)

    return pl.pallas_call(
        _vpt_kernel,
        out_shape=out_shape,
        grid_spec=pltpu.PrefetchScalarGridSpec(
            num_scalar_prefetch=0,
            grid=grid,
            in_specs=[
                pl.BlockSpec((Bt, S, D), lambda b: (b, 0, 0)),
                # Batch-invariant: same block index every step -> stays resident.
                pl.BlockSpec((1, T, D), lambda b: (0, 0, 0)),
            ],
            out_specs=pl.BlockSpec((Bt, S + T, D), lambda b: (b, 0, 0)),
        ),
        compiler_params=pltpu.CompilerParams(
            dimension_semantics=("parallel",),
            vmem_limit_bytes=32 * 1024 * 1024,
        ),
    )(x, prompt_embeddings)


if __name__ == "__main__":
    # Small shapes consistent with the module: D = 384 is fixed by the spec.
    # num_tokens = 8 keeps the bulk tail copy sublane-phase aligned for f32.
    B, S, D = 2, 8, 384
    num_tokens = 8

    key = jax.random.PRNGKey(0)
    kx, kp = jax.random.split(key)
    x = jax.random.normal(kx, (B, S, D), dtype=jnp.float32)
    # PyTorch init is zeros; use small random values so the concat is checkable.
    prompt_embeddings = 0.02 * jax.random.normal(
        kp, (1, num_tokens, D), dtype=jnp.float32
    )

    out = vpt_forward(x, prompt_embeddings)
    out = jax.block_until_ready(out)

    # Pure-JAX reference of the PyTorch forward.
    ref = jnp.concatenate(
        [x[:, :1, :],
         jnp.broadcast_to(prompt_embeddings, (B, num_tokens, D)),
         x[:, 1:, :]],
        axis=1,
    )
    assert out.shape == (B, S + num_tokens, D), out.shape
    assert jnp.allclose(out, ref), "mismatch vs reference"

    print("KERNEL_OK")
</pallas_src>

<mosaic_0001>
module attributes {stable_mosaic.version = 11 : i64} {
  func.func @_vpt_kernel(%arg0: i32, %arg1: memref<1x8x384xf32, #tpu.memory_space<vmem>>, %arg2: memref<1x8x384xf32, #tpu.memory_space<vmem>>, %arg3: memref<1x16x384xf32, #tpu.memory_space<vmem>>) attributes {dimension_semantics = [#tpu.dimension_semantics<parallel>], iteration_bounds = array<i64: 2>, scalar_prefetch = 0 : i64, scratch_operands = 0 : i64, tpu.core_type = #tpu.core_type<tc>, window_params = [{transform_indices = @transform_0, window_bounds = array<i64: 1, 8, 384>}, {pipeline_mode = #tpu.pipeline_mode<synchronous>, transform_indices = @transform_1, window_bounds = array<i64: 1, 8, 384>}, {transform_indices = @transform_2, window_bounds = array<i64: 1, 16, 384>}]} {
    %c0 = arith.constant 0 : index
    %c0_0 = arith.constant 0 : index
    %c0_1 = arith.constant 0 : index
    %0 = vector.load %arg1[%c0, %c0_0, %c0_1] : memref<1x8x384xf32, #tpu.memory_space<vmem>>, vector<1x1x384xf32>
    %c0_2 = arith.constant 0 : index
    %c0_3 = arith.constant 0 : index
    %c0_4 = arith.constant 0 : index
    %1 = vector.load %arg3[%c0_2, %c0_3, %c0_4] : memref<1x16x384xf32, #tpu.memory_space<vmem>>, vector<1x1x384xf32>
    tpu.vector_store %arg3[%c0_2, %c0_3, %c0_4], %0 {strides = array<i32>} : memref<1x16x384xf32, #tpu.memory_space<vmem>>, vector<1x1x384xf32>,
    %c0_5 = arith.constant 0 : index
    %c0_6 = arith.constant 0 : index
    %c0_7 = arith.constant 0 : index
    %2 = vector.load %arg2[%c0_5, %c0_6, %c0_7] : memref<1x8x384xf32, #tpu.memory_space<vmem>>, vector<1x8x384xf32>
    %c0_8 = arith.constant 0 : index
    %c1 = arith.constant 1 : index
    %c0_9 = arith.constant 0 : index
    %3 = vector.load %arg3[%c0_8, %c1, %c0_9] : memref<1x16x384xf32, #tpu.memory_space<vmem>>, vector<1x8x384xf32>
    tpu.vector_store %arg3[%c0_8, %c1, %c0_9], %2 {strides = array<i32>} : memref<1x16x384xf32, #tpu.memory_space<vmem>>, vector<1x8x384xf32>,
    %c0_10 = arith.constant 0 : index
    %c1_11 = arith.constant 1 : index
    %c0_12 = arith.constant 0 : index
    %4 = vector.load %arg1[%c0_10, %c1_11, %c0_12] : memref<1x8x384xf32, #tpu.memory_space<vmem>>, vector<1x7x384xf32>
    %c0_13 = arith.constant 0 : index
    %c9 = arith.constant 9 : index
    %c0_14 = arith.constant 0 : index
    %5 = vector.load %arg3[%c0_13, %c9, %c0_14] : memref<1x16x384xf32, #tpu.memory_space<vmem>>, vector<1x7x384xf32>
    tpu.vector_store %arg3[%c0_13, %c9, %c0_14], %4 {strides = array<i32>} : memref<1x16x384xf32, #tpu.memory_space<vmem>>, vector<1x7x384xf32>,
    return
  }
  func.func @transform_0(%arg0: i32) -> (i32, i32, i32) {
    %c0_i32 = arith.constant 0 : i32
    %c0_i32_0 = arith.constant 0 : i32
    %c0_i32_1 = arith.constant 0 : i32
    return %arg0, %c0_i32, %c0_i32_0 : i32, i32, i32
  }
  func.func @transform_1(%arg0: i32) -> (i32, i32, i32) {
    %c0_i32 = arith.constant 0 : i32
    %c0_i32_0 = arith.constant 0 : i32
    %c0_i32_1 = arith.constant 0 : i32
    %c0_i32_2 = arith.constant 0 : i32
    return %c0_i32, %c0_i32_0, %c0_i32_1 : i32, i32, i32
  }
  func.func @transform_2(%arg0: i32) -> (i32, i32, i32) {
    %c0_i32 = arith.constant 0 : i32
    %c0_i32_0 = arith.constant 0 : i32
    %c0_i32_1 = arith.constant 0 : i32
    return %arg0, %c0_i32, %c0_i32_0 : i32, i32, i32
  }
}

</mosaic_0001>

<llo_original>
// kernel: tpu_custom_call.1
$region0: #{tpu_custom_call.1}
  #allocation0 [shape = 'u32[]', space=smem, size = 0x4, offset = 0x4, fixed_abs, tag = 'smem constant byte address 0x4 - core index']
  #allocation1 [shape = 'u32[144,128]{1,0:T(1,128)}', space=vmem, size = 0x12000, scoped, tag = 'internal scratch']
  %s0 = inlined_call_operand.hbm [shape: f32[2,8,384], index: 0, kind: input, shape index: {}]
  %s1 = inlined_call_operand.hbm [shape: f32[1,8,384], index: 1, kind: input, shape index: {}]
  %s2 = inlined_call_operand.hbm [shape: f32[2,16,384], index: 2, kind: output, shape index: {}]
  %s3 = sld [smem:[#allocation0]]
  $region49: #{tpu_custom_call.1} parent=0
    _
  %s5 = ssub.s32 1, %s3
  %s6 = scalar_select 0, %s5, %s3
  $region1: #{tpu_custom_call.1} parent=0
    #allocation2 [shape = 'u8[24576]{0}', space=vmem, size = 0x6000, scoped, tag = 'input window, operand 0']
    #allocation3 [shape = 's32[2]{0}', space=sflag, size = 0x8, scoped, tag = 'scoped memory for tpu_custom_call.1']
    #allocation4 [shape = 's32[2]{0}', space=sflag, size = 0x8, scoped, tag = 'scoped memory for tpu_custom_call.1']
    #allocation5 [shape = 'u8[12288]{0}', space=vmem, size = 0x3000, scoped, tag = 'input window, operand 1, single buffered']
    #allocation6 [shape = 's32[1]{0}', space=sflag, size = 0x4, scoped, tag = 'scoped memory for tpu_custom_call.1']
    #allocation7 [shape = 'u8[49152]{0}', space=vmem, size = 0xc000, scoped, tag = 'output window, operand 0']
    %7 = vsyncpa [#allocation3], 0
    %s8 = scalar_lea.sflag [#allocation3], 1
    %9 = vsyncpa %s8, 0
    %10 = vsyncpa [#allocation6], 0
    %11 = vsyncpa [#allocation4], 0
    %s12 = scalar_lea.sflag [#allocation4], 1
    %13 = vsyncpa %s12, 0
    loop: start=0, step=1, limit=4
    $region2: #{tpu_custom_call.1} parent=1 // loop_pre_header
      _
    $region3: #{tpu_custom_call.1} parent=1 // loop_header
      %s15 = sphi 0, %s19
      %p16 = scmp.ge.s32.totalorder %s15, 4
      %s25 = sphi 0, %s27
      %s28 = sphi 0, %s25
      %s29 = sphi 0, %s28
      %s45 = sphi 0, %s29
      %s49 = sphi 0, %s49
      %s51 = sphi 0, %s49
      %s52 = sphi 0, %s51
      %s66 = sphi 0, %s52
      %s72 = sphi 0, %s74
      %s75 = sphi 0, %s72
      %s76 = sphi 0, %s75
      %s92 = sphi 0, %s76
    $region4: #{tpu_custom_call.1} parent=1 // loop_header_branch
      %18 = sbr.rel (%p16) target = $region8
    $region5: #{tpu_custom_call.1} parent=1 // loop_body
      %s20 = ssub.s32 %s15, 1
      %s21 = ssub.s32 %s15, 2
      %s22 = sadd.s32 %s15, 1
      %s23 = ssub.s32 %s15, %s22
      %p24 = scmp.eq.s32.totalorder %s23, 0
      %s26 = sadd.s32 %s25, 1
      %s27 = scalar_select %p24, %s25, %s26
      %p30 = pneg %p24
      %p31 = scmp.eq.s32.totalorder %s15, 1
      %p32 = por %p30, %p31
      %p33 = scmp.ne.s32.totalorder %s25, %s28
      %p34 = scmp.eq.s32.totalorder %s15, 0
      %p35 = por %p33, %p34
      %p36 = scmp.ne.s32.totalorder %s25, %s28
      %p37 = scmp.eq.s32.totalorder %s20, 1
      %p38 = por %p36, %p37
      %p39 = scmp.ne.s32.totalorder %s28, %s29
      %p40 = scmp.eq.s32.totalorder %s20, 0
      %p41 = por %p39, %p40
      %p42 = scmp.ne.s32.totalorder %s28, %s29
      %p43 = scmp.eq.s32.totalorder %s21, 1
      %p44 = por %p42, %p43
      %p46 = scmp.ne.s32.totalorder %s29, %s45
      %p47 = scmp.eq.s32.totalorder %s21, 0
      %p48 = por %p46, %p47
      %s50 = sadd.s32 %s49, 1
      %p53 = scmp.eq.s32.totalorder %s15, 1
      %p54 = scmp.ne.s32.totalorder %s49, %s51
      %p55 = scmp.eq.s32.totalorder %s15, 0
      %p56 = por %p54, %p55
      %p57 = scmp.ne.s32.totalorder %s49, %s51
      %p58 = scmp.eq.s32.totalorder %s20, 1
      %p59 = por %p57, %p58
      %p60 = scmp.ne.s32.totalorder %s51, %s52
      %p61 = scmp.eq.s32.totalorder %s20, 0
      %p62 = por %p60, %p61
      %p63 = scmp.ne.s32.totalorder %s51, %s52
      %p64 = scmp.eq.s32.totalorder %s21, 1
      %p65 = por %p63, %p64
      %p67 = scmp.ne.s32.totalorder %s52, %s66
      %p68 = scmp.eq.s32.totalorder %s21, 0
      %p69 = por %p67, %p68
      %s70 = ssub.s32 %s15, %s22
      %p71 = scmp.eq.s32.totalorder %s70, 0
      %s73 = sadd.s32 %s72, 1
      %s74 = scalar_select %p71, %s72, %s73
      %p77 = pneg %p71
      %p78 = scmp.eq.s32.totalorder %s15, 1
      %p79 = por %p77, %p78
      %p80 = scmp.ne.s32.totalorder %s72, %s75
      %p81 = scmp.eq.s32.totalorder %s15, 0
      %p82 = por %p80, %p81
      %p83 = scmp.ne.s32.totalorder %s72, %s75
      %p84 = scmp.eq.s32.totalorder %s20, 1
      %p85 = por %p83, %p84
      %p86 = scmp.ne.s32.totalorder %s75, %s76
      %p87 = scmp.eq.s32.totalorder %s20, 0
      %p88 = por %p86, %p87
      %p89 = scmp.ne.s32.totalorder %s75, %s76
      %p90 = scmp.eq.s32.totalorder %s21, 1
      %p91 = por %p89, %p90
      %p93 = scmp.ne.s32.totalorder %s76, %s92
      %p94 = scmp.eq.s32.totalorder %s21, 0
      %p95 = por %p93, %p94
      %p96 = scmp.le.s32.totalorder 1, %s15
      %p97 = scmp.lt.s32.totalorder %s15, 3
      %p98 = pnand %p96, %p97
      %p99 = pneg %p98
      // Predicated region
      $region9: #{tpu_custom_call.1} parent=5 // pred_check
        _
      $region10: #{tpu_custom_call.1} parent=5 // pred_check_branch
        %101 = sbr.rel (%p98) target = $region12
      $region11: #{tpu_custom_call.1} parent=5 // pred_region
        %s102 = ssub.s32 %s15, 1
        // Predicated region
        $region13: #{tpu_custom_call.1} parent=11 // pred_check
          %p103 = pneg %p62
        $region14: #{tpu_custom_call.1} parent=11 // pred_check_branch
          %105 = sbr.rel (%p103) target = $region16
        $region15: #{tpu_custom_call.1} parent=11 // pred_region
          %s107 = ssub.s32 384, 384
          %108 = vsyncadd [#allocation6], %s107
          %s110 = sshll.u32 [#allocation5], 4
          %s111 = int_to_ptr.vmem [resolvable:$true] %s110
          %113 = dma.hbm_to_vmem [thread:$0]  %s1, 384, %s111, [#allocation6]
        $region16: #{tpu_custom_call.1} parent=11 // pred_fallthru
          _
      $region12: #{tpu_custom_call.1} parent=5 // pred_fallthru
        _
      %p114 = scmp.lt.s32.totalorder %s15, 2
      // Predicated region
      $region17: #{tpu_custom_call.1} parent=5 // pred_check
        %p115 = pneg %p114
      $region18: #{tpu_custom_call.1} parent=5 // pred_check_branch
        %117 = sbr.rel (%p115) target = $region20
      $region19: #{tpu_custom_call.1} parent=5 // pred_region
        // Predicated region
        $region21: #{tpu_custom_call.1} parent=19 // pred_check
          %p118 = pneg %p35
        $region22: #{tpu_custom_call.1} parent=19 // pred_check_branch
          %120 = sbr.rel (%p118) target = $region24
        $region23: #{tpu_custom_call.1} parent=19 // pred_region
          %s121 = sand.u32 %s25, 1
          %s122 = scalar_lea.sflag [#allocation3], %s121
          %s123 = sand.u32 %s25, 1
          %s124 = smul.addr %s123, 24
          %s125 = scalar_lea.vmem [#allocation2], %s124
          %s127 = ssub.s32 384, 384
          %128 = vsyncadd %s122, %s127
          %s129 = smul.addr %s15, 3
          %s130 = smul.addr %s129, 128
          %s131 = scalar_lea.hbm %s0, %s130
          %s133 = sshll.u32 %s125, 4
          %s134 = int_to_ptr.vmem [resolvable:$true] %s133
          %136 = dma.hbm_to_vmem [thread:$0]  %s131, 384, %s134, %s122
        $region24: #{tpu_custom_call.1} parent=19 // pred_fallthru
          _
      $region20: #{tpu_custom_call.1} parent=5 // pred_fallthru
        _
      %p137 = scmp.le.s32.totalorder 1, %s15
      %p138 = scmp.lt.s32.totalorder %s15, 3
      %p139 = pnand %p137, %p138
      %p140 = pneg %p139
      // Predicated region
      $region25: #{tpu_custom_call.1} parent=5 // pred_check
        _
      $region26: #{tpu_custom_call.1} parent=5 // pred_check_branch
        %142 = sbr.rel (%p139) target = $region28
      $region27: #{tpu_custom_call.1} parent=5 // pred_region
        %s143 = ssub.s32 %s15, 1
        %s144 = sand.u32 %s28, 1
        %s145 = scalar_lea.sflag [#allocation3], %s144
        %s146 = sand.u32 %s28, 1
        %s147 = smul.addr %s146, 24
        %s148 = scalar_lea.vmem [#allocation2], %s147
        // Predicated region
        $region29: #{tpu_custom_call.1} parent=27 // pred_check
          %p149 = pneg %p41
        $region30: #{tpu_custom_call.1} parent=27 // pred_check_branch
          %151 = sbr.rel (%p149) target = $region32
        $region31: #{tpu_custom_call.1} parent=27 // pred_region
          %152 = dma.done %s145, 384
        $region32: #{tpu_custom_call.1} parent=27 // pred_fallthru
          _
        // Predicated region
        $region33: #{tpu_custom_call.1} parent=27 // pred_check
          %p153 = pneg %p62
        $region34: #{tpu_custom_call.1} parent=27 // pred_check_branch
          %155 = sbr.rel (%p153) target = $region36
        $region35: #{tpu_custom_call.1} parent=27 // pred_region
          %156 = dma.done [#allocation6], 384
        $region36: #{tpu_custom_call.1} parent=27 // pred_fallthru
          _
        %s157 = sand.u32 %s28, 1
        %s158 = scalar_lea.sflag [#allocation3], %s157
        %s159 = sand.u32 %s28, 1
        %s160 = smul.addr %s159, 24
        %s161 = scalar_lea.vmem [#allocation2], %s160
        %p162 = pneg %p41
        %p163 = pneg %p38
        %p164 = pneg %p62
        %p165 = pneg %p59
        %p166 = pneg %p88
        %p167 = pneg %p85
        %s168 = sand.u32 %s75, 1
        %s169 = scalar_lea.sflag [#allocation4], %s168
        %s170 = sand.u32 %s75, 1
        %s171 = smul.addr %s170, 48
        %s172 = scalar_lea.vmem [#allocation7], %s171
        %v173 = vld [vmem:[%s148] ss:$8 sm:$0x7]
        %v174 = vlaneseq
        %vm175 = vcmp.ge.s32.totalorder %v174, 0
        %vm176 = vcmp.lt.s32.totalorder %v174, 384
        %vm177 = vmand %vm175, %vm176
        %178 = vst.msk [vmem:[%s172] ss:$8 sm:$0x7] %vm177, %v173
        %179 = vst.msk [vmem:[%s172] ss:$8 sm:$0x0] %vm177, %v173
        %v180 = vld [vmem:[#allocation5] sm:$0xff]
        %v181 = vld [vmem:[#allocation5 + $0x8] sm:$0xff]
        %v182 = vld [vmem:[#allocation5 + $0x10] sm:$0xff]
        %v186 = vrot.slane %v180, 7
        %v187 = vrot.slane %v181, 7
        %v188 = vrot.slane %v182, 7
        %192 = vst [vmem:[%s172] sm:$0xfe] %v186
        %193 = vst [vmem:[%s172 + $0x8] sm:$0xfe] %v187
        %194 = vst [vmem:[%s172 + $0x10] sm:$0xfe] %v188
        %195 = vst [vmem:[%s172 + $0x18] sm:$0x1] %v186
        %196 = vst [vmem:[%s172 + $0x20] sm:$0x1] %v187
        %197 = vst [vmem:[%s172 + $0x28] sm:$0x1] %v188
        %v198 = vld [vmem:[%s148] sm:$0xfe]
        %v199 = vld [vmem:[%s148 + $0x8] sm:$0xfe]
        %v200 = vld [vmem:[%s148 + $0x10] sm:$0xfe]
        %201 = vst [vmem:[%s172 + $0x18] sm:$0xfe] %v198
        %202 = vst [vmem:[%s172 + $0x20] sm:$0xfe] %v199
        %203 = vst [vmem:[%s172 + $0x28] sm:$0xfe] %v200
        %s204 = sand.u32 %s75, 1
        %s205 = scalar_lea.sflag [#allocation4], %s204
        %s206 = sand.u32 %s75, 1
        %s207 = smul.addr %s206, 48
        %s208 = scalar_lea.vmem [#allocation7], %s207
        // Predicated region
        $region37: #{tpu_custom_call.1} parent=27 // pred_check
          %p209 = pneg %p85
        $region38: #{tpu_custom_call.1} parent=27 // pred_check_branch
          %211 = sbr.rel (%p209) target = $region40
        $region39: #{tpu_custom_call.1} parent=27 // pred_region
          %s213 = ssub.s32 768, 768
          %214 = vsyncadd %s205, %s213
          %s215 = smul.addr %s20, 6
          %s216 = smul.addr %s215, 128
          %s217 = scalar_lea.hbm %s2, %s216
          %s218 = sshll.u32 %s208, 4
          %s219 = int_to_ptr.vmem [resolvable:$true] %s218
          %224 = dma.vmem_to_hbm [thread:$0]  %s219, 768, %s217, %s205, 384, 384, 24
        $region40: #{tpu_custom_call.1} parent=27 // pred_fallthru
          _
      $region28: #{tpu_custom_call.1} parent=5 // pred_fallthru
        _
      %p225 = scmp.le.s32.totalorder 2, %s15
      // Predicated region
      $region41: #{tpu_custom_call.1} parent=5 // pred_check
        %p226 = pneg %p225
      $region42: #{tpu_custom_call.1} parent=5 // pred_check_branch
        %228 = sbr.rel (%p226) target = $region44
      $region43: #{tpu_custom_call.1} parent=5 // pred_region
        %s229 = ssub.s32 %s15, 2
        // Predicated region
        $region45: #{tpu_custom_call.1} parent=43 // pred_check
          %p230 = pneg %p91
        $region46: #{tpu_custom_call.1} parent=43 // pred_check_branch
          %232 = sbr.rel (%p230) target = $region48
        $region47: #{tpu_custom_call.1} parent=43 // pred_region
          %s233 = sand.u32 %s76, 1
          %s234 = scalar_lea.sflag [#allocation4], %s233
          %s235 = sand.u32 %s76, 1
          %s236 = smul.addr %s235, 48
          %s237 = scalar_lea.vmem [#allocation7], %s236
          %238 = dma.done %s234, 768
        $region48: #{tpu_custom_call.1} parent=43 // pred_fallthru
          _
      $region44: #{tpu_custom_call.1} parent=5 // pred_fallthru
        _
    $region6: #{tpu_custom_call.1} parent=1 // loop_footer
      %s19 = sadd.s32 1, %s15
    $region7: #{tpu_custom_call.1} parent=1 // loop_footer_branch
      %14 = sbr.rel target = $region3
    $region8: #{tpu_custom_call.1} parent=1 // loop_exit
      _
    %239 = vsyncpa [#allocation3], 1
    %s240 = scalar_lea.sflag [#allocation3], 1
    %241 = vsyncpa %s240, 1
    %242 = vsyncpa [#allocation6], 1
    %243 = vsyncpa [#allocation4], 1
    %s244 = scalar_lea.sflag [#allocation4], 1
    %245 = vsyncpa %s244, 1

</llo_original>
